<compile_context>
chip_gen: v6e
topology: v6e:2x2x1
jax: 0.10.0
libtpu: 0.0.40
codegen_flags: <defaults>
</compile_context>

<pallas_src>
import jax
import jax.numpy as jnp
from jax.experimental import pallas as pl
from jax.experimental.pallas import tpu as pltpu

B, J, E, H, T = 2, 16, 32, 64, 100   # batch, joints, temb dim, hidden, diffusion steps


# ---------------------------------------------------------------------------
# Pallas kernel: q_sample + per-joint MLP decoder (fused joints2d|uncertainty head)
#
# Operand packing (3 DMAs total):
#   xin_ref   (R, 4)    : [x0_x, x0_y, noise_x, noise_y] per joint row
#   cond_ref  (B, H+8)  : [temb @ w1t + b1 (H) | sqrt_acp[t] | sqrt_1m_acp[t] | pad(6)]
#   wslab_ref (H+3, H)  : rows 0..H-1   = w2 fused [joints2d|uncertainty], zero-padded to (H, H)
#                          rows H..H+1  = w1 (2, H)
#                          row  H+2     = b2 fused, zero-padded to (1, H)
# Output: (R, 3) == concat(joints2d, uncertainty) per row.
# ---------------------------------------------------------------------------
def _decoder_diffusion_kernel(xin_ref, cond_ref, wslab_ref, out_ref):
    n_batch = cond_ref.shape[0]
    hidden = wslab_ref.shape[1]
    jn = xin_ref.shape[0] // n_batch

    w2 = wslab_ref[0:hidden, :]                         # (H, H)  cols >= 3 are zero
    w1 = wslab_ref[hidden:hidden + 2, :]                # (2, H)
    b2 = wslab_ref[hidden + 2:hidden + 3, :]            # (1, H)

    # static unroll over batch halves (n_batch is tiny); per-batch schedule scalars
    # and timestep-conditioning bias come from one row of `cond_ref` (no (R,H) repeat).
    for b in range(n_batch):
        rows = pl.ds(b * jn, jn)
        x = xin_ref[rows, :]                            # (J, 4)
        a = cond_ref[b:b + 1, hidden:hidden + 1]        # (1, 1) sqrt(alpha_cumprod[t_b])
        s = cond_ref[b:b + 1, hidden + 1:hidden + 2]    # (1, 1) sqrt(1 - alpha_cumprod[t_b])

        # diffusion q_sample: x_t = a * x0 + s * noise
        xt = a * x[:, 0:2] + s * x[:, 2:4]              # (J, 2)

        # first layer: K=2 -> plain VPU FMAs; temb bias broadcast from the (1,H) row.
        tb = cond_ref[b:b + 1, 0:hidden]                # (1, H)
        h = xt[:, 0:1] * w1[0:1, :] + xt[:, 1:2] * w1[1:2, :] + tb      # (J, H)
        h = jnp.maximum(h, 0.0)

        # fused output heads == torch.cat((joints2d, uncertainty), dim=-1); one push.
        y = jnp.dot(h, w2, preferred_element_type=jnp.float32) + b2     # (J, H)
        out_ref[rows, :] = y[:, 0:3]


def _pallas_train_step(xin, cond, wslab):
    rows = xin.shape[0]
    return pl.pallas_call(
        _decoder_diffusion_kernel,
        out_shape=jax.ShapeDtypeStruct((rows, 3), jnp.float32),
        in_specs=[pl.BlockSpec(memory_space=pltpu.MemorySpace.VMEM) for _ in range(3)],
        out_specs=pl.BlockSpec(memory_space=pltpu.MemorySpace.VMEM),
    )(xin, cond, wslab)


# ---------------------------------------------------------------------------
# Glue: schedule, timestep embedding, parameters, ModelWrapper-style API
# ---------------------------------------------------------------------------
def make_schedule(num_timesteps):
    betas = jnp.linspace(1e-4, 0.02, num_timesteps, dtype=jnp.float32)
    acp = jnp.cumprod(1.0 - betas)
    return jnp.sqrt(acp), jnp.sqrt(1.0 - acp)


def timestep_embedding(t, dim):
    # NOTE: [cos, sin] order; many PyTorch diffusion impls use [sin, cos] —
    # keep consistent with the checkpoint if real weights are ever loaded.
    half = dim // 2
    freqs = jnp.exp(-jnp.log(10000.0) * jnp.arange(half, dtype=jnp.float32) / half)
    args = t.astype(jnp.float32)[:, None] * freqs[None, :]
    return jnp.concatenate([jnp.cos(args), jnp.sin(args)], axis=-1)       # (B, dim)


def init_params(key):
    ks = jax.random.split(key, 4)
    return dict(
        w1=0.1 * jax.random.normal(ks[0], (2, H), jnp.float32),
        w1t=0.1 * jax.random.normal(ks[1], (E, H), jnp.float32),
        b1=jnp.zeros((1, H), jnp.float32),
        w2j=0.1 * jax.random.normal(ks[2], (H, 2), jnp.float32),
        b2j=jnp.zeros((1, 2), jnp.float32),
        w2u=0.1 * jax.random.normal(ks[3], (H, 1), jnp.float32),
        b2u=jnp.zeros((1, 1), jnp.float32),
    )


def make_state(raw):
    """One-time param transform: fused head + packed weight slab + schedule tables."""
    w2 = jnp.concatenate([raw["w2j"], raw["w2u"]], axis=1)                # (H, 3)
    b2 = jnp.concatenate([raw["b2j"], raw["b2u"]], axis=1)                # (1, 3)
    wslab = jnp.concatenate(
        [jnp.pad(w2, ((0, 0), (0, H - 3))),      # (H, H)  rows 0..H-1
         raw["w1"],                              # (2, H)  rows H..H+1
         jnp.pad(b2, ((0, 0), (0, H - 3)))],     # (1, H)  row  H+2
        axis=0)                                  # (H+3, H)
    sqrt_acp, sqrt_1m_acp = make_schedule(T)
    return dict(wslab=wslab, w1t=raw["w1t"], b1=raw["b1"],
                sqrt_acp=sqrt_acp, sqrt_1m_acp=sqrt_1m_acp)


@jax.jit
def _train_forward(x0, state, key):
    bsz, jn, _ = x0.shape
    rows = bsz * jn

    k_t, k_n = jax.random.split(key)
    # uniform schedule sampler: t ~ U{0..T-1}, weights == 1
    t = jax.random.randint(k_t, (bsz,), 0, T, dtype=jnp.int32)
    weights = jnp.ones((bsz,), jnp.float32)
    noise = jax.random.normal(k_n, x0.shape, jnp.float32)

    a_b = state["sqrt_acp"][t][:, None]                     # (B, 1)
    s_b = state["sqrt_1m_acp"][t][:, None]                  # (B, 1)
    temb = timestep_embedding(t, E)                         # (B, E)
    tbias = temb @ state["w1t"] + state["b1"]               # (B, H) hoisted conditioning

    # pack the 3 kernel operands (all prep fuses into the single jitted program)
    cond = jnp.concatenate(
        [tbias, a_b, s_b, jnp.zeros((bsz, 6), jnp.float32)], axis=1)      # (B, H+8)
    xin = jnp.concatenate(
        [x0.reshape(rows, 2), noise.reshape(rows, 2)], axis=1)            # (R, 4)

    out = _pallas_train_step(xin, cond, state["wslab"])                   # (R, 3)
    joints2d = out.reshape(bsz, jn, 3)
    return {"joints2d": joints2d, "weights": weights}, (t, noise, temb)


def model_wrapper_forward(batch, state, key, training=True):
    """ModelWrapper.forward — training path, one jitted program incl. the Pallas kernel."""
    if not training:
        # TODO(synk): inference path (diffusion_eval.eval_step sampling loop) not implemented.
        raise NotImplementedError("only the training hot path is implemented")
    return _train_forward(batch["repr_clean"], state, key)


def reference(t, x0, noise, temb, raw, sa_tab, somb_tab):
    a = sa_tab[t][:, None, None]
    s = somb_tab[t][:, None, None]
    xt = a * x0 + s * noise
    h = jnp.maximum(
        jnp.einsum("bjc,ch->bjh", xt, raw["w1"])
        + (temb @ raw["w1t"])[:, None, :] + raw["b1"], 0.0)
    j2d = jnp.einsum("bjh,hc->bjc", h, raw["w2j"]) + raw["b2j"]
    unc = jnp.einsum("bjh,hc->bjc", h, raw["w2u"]) + raw["b2u"]
    return jnp.concatenate([j2d, unc], axis=-1)


if __name__ == "__main__":
    key = jax.random.PRNGKey(0)
    k_param, k_data, k_fwd = jax.random.split(key, 3)
    raw = init_params(k_param)
    state = make_state(raw)
    batch = {"repr_clean": jax.random.normal(k_data, (B, J, 2), jnp.float32)}

    pred, aux = model_wrapper_forward(batch, state, k_fwd, training=True)
    joints2d = jax.block_until_ready(pred["joints2d"])
    weights = jax.block_until_ready(pred["weights"])

    assert joints2d.shape == (B, J, 3) and weights.shape == (B,)
    t, noise, temb = aux
    ref = reference(t, batch["repr_clean"], noise, temb, raw,
                    state["sqrt_acp"], state["sqrt_1m_acp"])
    assert jnp.allclose(joints2d, ref, atol=1e-4, rtol=1e-4), "mismatch vs JAX reference"
    print("KERNEL_OK")
</pallas_src>

<mosaic_0001>
module attributes {stable_mosaic.version = 11 : i64} {
  func.func @_decoder_diffusion_kernel(%arg0: memref<32x4xf32, #tpu.memory_space<vmem>>, %arg1: memref<2x72xf32, #tpu.memory_space<vmem>>, %arg2: memref<67x64xf32, #tpu.memory_space<vmem>>, %arg3: memref<32x3xf32, #tpu.memory_space<vmem>>) attributes {dimension_semantics = [], scalar_prefetch = 0 : i64, scratch_operands = 0 : i64, tpu.core_type = #tpu.core_type<tc>} {
    %c0 = arith.constant 0 : index
    %c0_0 = arith.constant 0 : index
    %0 = vector.load %arg2[%c0, %c0_0] : memref<67x64xf32, #tpu.memory_space<vmem>>, vector<64x64xf32>
    %c64 = arith.constant 64 : index
    %c0_1 = arith.constant 0 : index
    %1 = vector.load %arg2[%c64, %c0_1] : memref<67x64xf32, #tpu.memory_space<vmem>>, vector<2x64xf32>
    %c66 = arith.constant 66 : index
    %c0_2 = arith.constant 0 : index
    %2 = vector.load %arg2[%c66, %c0_2] : memref<67x64xf32, #tpu.memory_space<vmem>>, vector<1x64xf32>
    %c0_3 = arith.constant 0 : index
    %c0_4 = arith.constant 0 : index
    %3 = vector.load %arg0[%c0_3, %c0_4] : memref<32x4xf32, #tpu.memory_space<vmem>>, vector<16x4xf32>
    %c0_5 = arith.constant 0 : index
    %c64_6 = arith.constant 64 : index
    %4 = vector.load %arg1[%c0_5, %c64_6] : memref<2x72xf32, #tpu.memory_space<vmem>>, vector<1x1xf32>
    %c0_7 = arith.constant 0 : index
    %c65 = arith.constant 65 : index
    %5 = vector.load %arg1[%c0_7, %c65] : memref<2x72xf32, #tpu.memory_space<vmem>>, vector<1x1xf32>
    %6 = vector.extract_strided_slice %3 {offsets = [0, 0], sizes = [16, 2], strides = [1, 1]} : vector<16x4xf32> to vector<16x2xf32>
    %7 = vector.broadcast %4 : vector<1x1xf32> to vector<16x2xf32>
    %8 = arith.mulf %7, %6 : vector<16x2xf32>
    %9 = vector.extract_strided_slice %3 {offsets = [0, 2], sizes = [16, 2], strides = [1, 1]} : vector<16x4xf32> to vector<16x2xf32>
    %10 = vector.broadcast %5 : vector<1x1xf32> to vector<16x2xf32>
    %11 = arith.mulf %10, %9 : vector<16x2xf32>
    %12 = arith.addf %8, %11 : vector<16x2xf32>
    %c0_8 = arith.constant 0 : index
    %c0_9 = arith.constant 0 : index
    %13 = vector.load %arg1[%c0_8, %c0_9] : memref<2x72xf32, #tpu.memory_space<vmem>>, vector<1x64xf32>
    %14 = vector.extract_strided_slice %12 {offsets = [0, 0], sizes = [16, 1], strides = [1, 1]} : vector<16x2xf32> to vector<16x1xf32>
    %15 = vector.extract_strided_slice %1 {offsets = [0, 0], sizes = [1, 64], strides = [1, 1]} : vector<2x64xf32> to vector<1x64xf32>
    %16 = vector.broadcast %14 : vector<16x1xf32> to vector<16x64xf32>
    %17 = vector.broadcast %15 : vector<1x64xf32> to vector<16x64xf32>
    %18 = arith.mulf %16, %17 : vector<16x64xf32>
    %19 = vector.extract_strided_slice %12 {offsets = [0, 1], sizes = [16, 1], strides = [1, 1]} : vector<16x2xf32> to vector<16x1xf32>
    %20 = vector.extract_strided_slice %1 {offsets = [1, 0], sizes = [1, 64], strides = [1, 1]} : vector<2x64xf32> to vector<1x64xf32>
    %21 = vector.broadcast %19 : vector<16x1xf32> to vector<16x64xf32>
    %22 = vector.broadcast %20 : vector<1x64xf32> to vector<16x64xf32>
    %23 = arith.mulf %21, %22 : vector<16x64xf32>
    %24 = arith.addf %18, %23 : vector<16x64xf32>
    %25 = vector.broadcast %13 : vector<1x64xf32> to vector<16x64xf32>
    %26 = arith.addf %24, %25 : vector<16x64xf32>
    %cst = arith.constant 0.000000e+00 : f32
    %27 = vector.broadcast %cst : f32 to vector<16x64xf32>
    %28 = arith.maximumf %26, %27 : vector<16x64xf32>
    %cst_10 = arith.constant dense<0.000000e+00> : vector<16x64xf32>
    %29 = tpu.matmul %28, %0, %cst_10 {dimension_numbers = #tpu.dot_dimension_numbers<[1], [0], [0], [1], [0, 0, 1, 1], [], []>} : vector<16x64xf32>, vector<64x64xf32>, vector<16x64xf32> -> vector<16x64xf32>
    %30 = vector.broadcast %2 : vector<1x64xf32> to vector<16x64xf32>
    %31 = arith.addf %29, %30 : vector<16x64xf32>
    %32 = vector.extract_strided_slice %31 {offsets = [0, 0], sizes = [16, 3], strides = [1, 1]} : vector<16x64xf32> to vector<16x3xf32>
    %c0_11 = arith.constant 0 : index
    %c0_12 = arith.constant 0 : index
    %33 = vector.load %arg3[%c0_11, %c0_12] : memref<32x3xf32, #tpu.memory_space<vmem>>, vector<16x3xf32>
    tpu.vector_store %arg3[%c0_11, %c0_12], %32 {strides = array<i32>} : memref<32x3xf32, #tpu.memory_space<vmem>>, vector<16x3xf32>,
    %c16 = arith.constant 16 : index
    %c0_13 = arith.constant 0 : index
    %34 = vector.load %arg0[%c16, %c0_13] : memref<32x4xf32, #tpu.memory_space<vmem>>, vector<16x4xf32>
    %c1 = arith.constant 1 : index
    %c64_14 = arith.constant 64 : index
    %35 = vector.load %arg1[%c1, %c64_14] : memref<2x72xf32, #tpu.memory_space<vmem>>, vector<1x1xf32>
    %c1_15 = arith.constant 1 : index
    %c65_16 = arith.constant 65 : index
    %36 = vector.load %arg1[%c1_15, %c65_16] : memref<2x72xf32, #tpu.memory_space<vmem>>, vector<1x1xf32>
    %37 = vector.extract_strided_slice %34 {offsets = [0, 0], sizes = [16, 2], strides = [1, 1]} : vector<16x4xf32> to vector<16x2xf32>
    %38 = vector.broadcast %35 : vector<1x1xf32> to vector<16x2xf32>
    %39 = arith.mulf %38, %37 : vector<16x2xf32>
    %40 = vector.extract_strided_slice %34 {offsets = [0, 2], sizes = [16, 2], strides = [1, 1]} : vector<16x4xf32> to vector<16x2xf32>
    %41 = vector.broadcast %36 : vector<1x1xf32> to vector<16x2xf32>
    %42 = arith.mulf %41, %40 : vector<16x2xf32>
    %43 = arith.addf %39, %42 : vector<16x2xf32>
    %c1_17 = arith.constant 1 : index
    %c0_18 = arith.constant 0 : index
    %44 = vector.load %arg1[%c1_17, %c0_18] : memref<2x72xf32, #tpu.memory_space<vmem>>, vector<1x64xf32>
    %45 = vector.extract_strided_slice %43 {offsets = [0, 0], sizes = [16, 1], strides = [1, 1]} : vector<16x2xf32> to vector<16x1xf32>
    %46 = vector.extract_strided_slice %1 {offsets = [0, 0], sizes = [1, 64], strides = [1, 1]} : vector<2x64xf32> to vector<1x64xf32>
    %47 = vector.broadcast %45 : vector<16x1xf32> to vector<16x64xf32>
    %48 = vector.broadcast %46 : vector<1x64xf32> to vector<16x64xf32>
    %49 = arith.mulf %47, %48 : vector<16x64xf32>
    %50 = vector.extract_strided_slice %43 {offsets = [0, 1], sizes = [16, 1], strides = [1, 1]} : vector<16x2xf32> to vector<16x1xf32>
    %51 = vector.extract_strided_slice %1 {offsets = [1, 0], sizes = [1, 64], strides = [1, 1]} : vector<2x64xf32> to vector<1x64xf32>
    %52 = vector.broadcast %50 : vector<16x1xf32> to vector<16x64xf32>
    %53 = vector.broadcast %51 : vector<1x64xf32> to vector<16x64xf32>
    %54 = arith.mulf %52, %53 : vector<16x64xf32>
    %55 = arith.addf %49, %54 : vector<16x64xf32>
    %56 = vector.broadcast %44 : vector<1x64xf32> to vector<16x64xf32>
    %57 = arith.addf %55, %56 : vector<16x64xf32>
    %cst_19 = arith.constant 0.000000e+00 : f32
    %58 = vector.broadcast %cst_19 : f32 to vector<16x64xf32>
    %59 = arith.maximumf %57, %58 : vector<16x64xf32>
    %cst_20 = arith.constant dense<0.000000e+00> : vector<16x64xf32>
    %60 = tpu.matmul %59, %0, %cst_20 {dimension_numbers = #tpu.dot_dimension_numbers<[1], [0], [0], [1], [0, 0, 1, 1], [], []>} : vector<16x64xf32>, vector<64x64xf32>, vector<16x64xf32> -> vector<16x64xf32>
    %61 = vector.broadcast %2 : vector<1x64xf32> to vector<16x64xf32>
    %62 = arith.addf %60, %61 : vector<16x64xf32>
    %63 = vector.extract_strided_slice %62 {offsets = [0, 0], sizes = [16, 3], strides = [1, 1]} : vector<16x64xf32> to vector<16x3xf32>
    %c16_21 = arith.constant 16 : index
    %c0_22 = arith.constant 0 : index
    %64 = vector.load %arg3[%c16_21, %c0_22] : memref<32x3xf32, #tpu.memory_space<vmem>>, vector<16x3xf32>
    tpu.vector_store %arg3[%c16_21, %c0_22], %63 {strides = array<i32>} : memref<32x3xf32, #tpu.memory_space<vmem>>, vector<16x3xf32>,
    return
  }
}

</mosaic_0001>

<llo_original>
// kernel: _train_forward.21
$region0: #{_train_forward.21}
  #allocation0 [shape = 'u32[]', space=smem, size = 0x4, offset = 0x4, fixed_abs, tag = 'smem constant byte address 0x4 - core index']
  #allocation1 [shape = 'u32[144,128]{1,0:T(1,128)}', space=vmem, size = 0x12000, scoped, tag = 'internal scratch']
  %s0 = inlined_call_operand.vmem [shape: f32[32,4], index: 0, kind: input, shape index: {}]
  %s1 = inlined_call_operand.vmem [shape: f32[2,72], index: 1, kind: input, shape index: {}]
  %s2 = inlined_call_operand.vmem [shape: f32[67,64], index: 2, kind: input, shape index: {}]
  %s3 = inlined_call_operand.vmem [shape: f32[32,3], index: 3, kind: output, shape index: {}]
  %s4 = sld [smem:[#allocation0]]
  $region22: #{_train_forward.21} parent=0
    _
  %s6 = ssub.s32 1, %s4
  %s7 = scalar_select 0, %s6, %s4
  // Predicated region
  $region2: #{_train_forward.21} parent=0 // pred_check
    _
  $region3: #{_train_forward.21} parent=0 // pred_check_branch
    %9 = sbr.rel (0) target = $region5
  $region4: #{_train_forward.21} parent=0 // pred_region
    _
  $region5: #{_train_forward.21} parent=0 // pred_fallthru
    _
  // Predicated region
  $region6: #{_train_forward.21} parent=0 // pred_check
    _
  $region7: #{_train_forward.21} parent=0 // pred_check_branch
    %11 = sbr.rel (0) target = $region9
  $region8: #{_train_forward.21} parent=0 // pred_region
    _
  $region9: #{_train_forward.21} parent=0 // pred_fallthru
    _
  // Predicated region
  $region10: #{_train_forward.21} parent=0 // pred_check
    _
  $region11: #{_train_forward.21} parent=0 // pred_check_branch
    %13 = sbr.rel (0) target = $region13
  $region12: #{_train_forward.21} parent=0 // pred_region
    _
  $region13: #{_train_forward.21} parent=0 // pred_fallthru
    _
  %v14 = vld [vmem:[%s2] sm:$0xff]
  %v15 = vld [vmem:[%s2 + $0x8] sm:$0xff]
  %v16 = vld [vmem:[%s2 + $0x10] sm:$0xff]
  %v17 = vld [vmem:[%s2 + $0x18] sm:$0xff]
  %v18 = vld [vmem:[%s2 + $0x20] sm:$0xff]
  %v19 = vld [vmem:[%s2 + $0x28] sm:$0xff]
  %v20 = vld [vmem:[%s2 + $0x30] sm:$0xff]
  %v21 = vld [vmem:[%s2 + $0x38] sm:$0xff]
  %v22 = vld [vmem:[%s2 + $0x40] sm:$0x3]
  %v23 = vld [vmem:[%s2 + $0x42] sm:$0x1]
  %v24 = vld [vmem:[%s0] sm:$0xff]
  %v25 = vld [vmem:[%s0 + $0x8] sm:$0xff]
  %v26 = vld [vmem:[%s1] sm:$0x1]
  %28 = vrot.lane.b32.xlu0 %v26, 64
  %v29 = vpop.permute.xlu0 %28
  %s30 = vtos %v29
  %v31 = vstv %s30
  %v33 = vmul.f32 %v31, %v24
  %v34 = vmul.f32 %v31, %v25
  %35 = vrot.lane.b32.xlu0 %v26, 63
  %v36 = vpop.permute.xlu0 %35
  %s37 = vtos %v36
  %v38 = vstv %s37
  %v40 = vmul.f32 %v38, %v24
  %v41 = vmul.f32 %v38, %v25
  %44 = vrot.lane.b32.xlu0 %v40, 126
  %v45 = vpop.permute.xlu0 %44
  %46 = vrot.lane.b32.xlu0 %v41, 126
  %v47 = vpop.permute.xlu0 %46
  %v50 = vadd.f32 %v33, %v45
  %v51 = vadd.f32 %v34, %v47
  %53 = vset.pattern.permute.xlu0 0
  %54 = vperm.xlu0 %53, %v50
  %v55 = vpop.permute.xlu0 %54
  %58 = vset.pattern.permute.xlu0 0
  %59 = vperm.xlu0 %58, %v51
  %v60 = vpop.permute.xlu0 %59
  %v62 = vlaneseq
  %v63 = vshrl.u32 %v62, 7
  %v64 = vsub.s32 0, %v63
  %v65 = vrot.slane %v22, %v64
  %v66 = vmul.f32 %v55, %v65
  %v67 = vmul.f32 %v60, %v65
  %68 = vset.pattern.permute.xlu0 1
  %69 = vperm.xlu0 %68, %v50
  %v70 = vpop.permute.xlu0 %69
  %72 = vset.pattern.permute.xlu0 1
  %73 = vperm.xlu0 %72, %v51
  %v74 = vpop.permute.xlu0 %73
  %v76 = vlaneseq
  %v77 = vshrl.u32 %v76, 7
  %v78 = vsub.s32 1, %v77
  %v79 = vrot.slane %v22, %v78
  %v80 = vmul.f32 %v70, %v79
  %v81 = vmul.f32 %v74, %v79
  %v82 = vadd.f32 %v66, %v80
  %v83 = vadd.f32 %v67, %v81
  %v84 = vlaneseq
  %v85 = vshrl.u32 %v84, 7
  %v86 = vsub.s32 0, %v85
  %v87 = vrot.slane %v26, %v86
  %v88 = vadd.f32 %v82, %v87
  %v89 = vadd.f32 %v83, %v87
  %v90 = vmax.f32 %v88, 0.0
  %v91 = vmax.f32 %v89, 0.0
  %v92 = vlaneseq
  %v93 = vshrl.u32 %v92, 7
  %v94 = vsub.s32 0, %v93
  %v95 = vrot.slane %v23, %v94
  %vm96 = vcmask 523264
  %v98 = vsel %vm96, %v90, 0
  %v101 = vsel %vm96, %v91, 0
  %103 = vmatprep.subr.mxu0 0.0
  %104 = vmatpush1.msra.mxu0 0.0
  %105 = vmatprep.subr.mxu0 0.0
  %106 = vmatpush1.msra.mxu0 0.0
  %107 = vmatprep.subr.mxu0 0.0
  %108 = vmatpush1.msra.mxu0 0.0
  %109 = vmatprep.subr.mxu0 0.0
  %110 = vmatpush1.msra.mxu0 0.0
  %111 = vmatprep.subr.mxu0 0.0
  %112 = vmatpush1.msra.mxu0 0.0
  %113 = vmatprep.subr.mxu0 0.0
  %114 = vmatpush1.msra.mxu0 0.0
  %115 = vmatprep.subr.mxu0 0.0
  %116 = vmatpush1.msra.mxu0 0.0
  %117 = vmatprep.subr.mxu0 0.0
  %118 = vmatpush1.msra.mxu0 0.0
  %119 = vmatprep.subr.mxu0 0.0
  %120 = vmatpush1.msra.mxu0 %v21
  %121 = vmatprep.subr.mxu0 0.0
  %122 = vmatpush1.msra.mxu0 %v20
  %123 = vmatprep.subr.mxu0 0.0
  %124 = vmatpush1.msra.mxu0 %v19
  %125 = vmatprep.subr.mxu0 0.0
  %126 = vmatpush1.msra.mxu0 %v18
  %127 = vmatprep.subr.mxu0 0.0
  %128 = vmatpush1.msra.mxu0 %v17
  %129 = vmatprep.subr.mxu0 0.0
  %130 = vmatpush1.msra.mxu0 %v16
  %131 = vmatprep.subr.mxu0 0.0
  %132 = vmatpush1.msra.mxu0 %v15
  %133 = vmatprep.subr.mxu0 0.0
  %134 = vmatpush1.msra.mxu0 %v14
  %135 = vmatprep.subr.mxu0 0.0
  %136 = vmatpush2.msra.mxu0 0.0
  %137 = vmatprep.subr.mxu0 0.0
  %138 = vmatpush2.msra.mxu0 0.0
  %139 = vmatprep.subr.mxu0 0.0
  %140 = vmatpush2.msra.mxu0 0.0
  %141 = vmatprep.subr.mxu0 0.0
  %142 = vmatpush2.msra.mxu0 0.0
  %143 = vmatprep.subr.mxu0 0.0
  %144 = vmatpush2.msra.mxu0 0.0
  %145 = vmatprep.subr.mxu0 0.0
  %146 = vmatpush2.msra.mxu0 0.0
  %147 = vmatprep.subr.mxu0 0.0
  %148 = vmatpush2.msra.mxu0 0.0
  %149 = vmatprep.subr.mxu0 0.0
  %150 = vmatpush2.msra.mxu0 0.0
  %151 = vmatprep.subr.mxu0 0.0
  %152 = vmatpush2.msra.mxu0 0.0
  %153 = vmatprep.subr.mxu0 0.0
  %154 = vmatpush2.msra.mxu0 0.0
  %155 = vmatprep.subr.mxu0 0.0
  %156 = vmatpush2.msra.mxu0 0.0
  %157 = vmatprep.subr.mxu0 0.0
  %158 = vmatpush2.msra.mxu0 0.0
  %159 = vmatprep.subr.mxu0 0.0
  %160 = vmatpush2.msra.mxu0 0.0
  %161 = vmatprep.subr.mxu0 0.0
  %162 = vmatpush2.msra.mxu0 0.0
  %163 = vmatprep.subr.mxu0 0.0
  %164 = vmatpush2.msra.mxu0 0.0
  %165 = vmatprep.subr.mxu0 0.0
  %166 = vmatpush2.msra.mxu0 0.0
  %167 = vmatprep.mubr.f32.mxu0 0.0
  %168 = vmatmul.mubr.f32.gmra.mxu0 %v98
  %v169 = vpop.f32.mrf.mxu0
  %v170 = vadd.f32 %v95, %v169
  %v171 = vpop.f32.mrf.mxu0
  %172 = vmatprep.mubr.f32.mxu0 0.0
  %173 = vmatmul.mubr.f32.gmra.mxu0 %v101
  %v174 = vpop.f32.mrf.mxu0
  %v175 = vadd.f32 %v95, %v174
  %v176 = vpop.f32.mrf.mxu0
  %177 = vdwg.mxu0
  %vm178 = vcmask 23552
  %179 = vst.msk [vmem:[%s3] sm:$0xff] %vm178, %v170
  %180 = vst.msk [vmem:[%s3 + $0x8] sm:$0xff] %vm178, %v175
  %v181 = vld [vmem:[%s0 + $0x10] sm:$0xff]
  %v182 = vld [vmem:[%s0 + $0x18] sm:$0xff]
  %v183 = vld [vmem:[%s1 + $0x1] sm:$0x1]
  %185 = vrot.lane.b32.xlu0 %v183, 64
  %v186 = vpop.permute.xlu0 %185
  %s187 = vtos %v186
  %v188 = vstv %s187
  %v190 = vmul.f32 %v188, %v181
  %v191 = vmul.f32 %v188, %v182
  %192 = vrot.lane.b32.xlu0 %v183, 63
  %v193 = vpop.permute.xlu0 %192
  %s194 = vtos %v193
  %v195 = vstv %s194
  %v197 = vmul.f32 %v195, %v181
  %v198 = vmul.f32 %v195, %v182
  %201 = vrot.lane.b32.xlu0 %v197, 126
  %v202 = vpop.permute.xlu0 %201
  %203 = vrot.lane.b32.xlu0 %v198, 126
  %v204 = vpop.permute.xlu0 %203
  %v207 = vadd.f32 %v190, %v202
  %v208 = vadd.f32 %v191, %v204
  %210 = vset.pattern.permute.xlu0 0
  %211 = vperm.xlu0 %210, %v207
  %v212 = vpop.permute.xlu0 %211
  %215 = vset.pattern.permute.xlu0 0
  %216 = vperm.xlu0 %215, %v208
  %v217 = vpop.permute.xlu0 %216
  %v219 = vmul.f32 %v212, %v65
  %v220 = vmul.f32 %v217, %v65
  %221 = vset.pattern.permute.xlu0 1
  %222 = vperm.xlu0 %221, %v207
  %v223 = vpop.permute.xlu0 %222
  %225 = vset.pattern.permute.xlu0 1
  %226 = vperm.xlu0 %225, %v208
  %v227 = vpop.permute.xlu0 %226
  %v229 = vmul.f32 %v223, %v79
  %v230 = vmul.f32 %v227, %v79
  %v231 = vadd.f32 %v219, %v229
  %v232 = vadd.f32 %v220, %v230
  %v233 = vlaneseq
  %v234 = vshrl.u32 %v233, 7
  %v235 = vsub.s32 0, %v234
  %v236 = vrot.slane %v183, %v235
  %v237 = vadd.f32 %v231, %v236
  %v238 = vadd.f32 %v232, %v236
  %v239 = vmax.f32 %v237, 0.0
  %v240 = vmax.f32 %v238, 0.0
  %v242 = vsel %vm96, %v239, 0
  %v245 = vsel %vm96, %v240, 0
  %247 = vmatprep.subr.mxu0 0.0
  %248 = vmatpush1.msra.mxu0 0.0
  %249 = vmatprep.subr.mxu0 0.0
  %250 = vmatpush1.msra.mxu0 0.0
  %251 = vmatprep.subr.mxu0 0.0
  %252 = vmatpush1.msra.mxu0 0.0
  %253 = vmatprep.subr.mxu0 0.0
  %254 = vmatpush1.msra.mxu0 0.0
  %255 = vmatprep.subr.mxu0 0.0
  %256 = vmatpush1.msra.mxu0 0.0
  %257 = vmatprep.subr.mxu0 0.0
  %258 = vmatpush1.msra.mxu0 0.0
  %259 = vmatprep.subr.mxu0 0.0
  %260 = vmatpush1.msra.mxu0 0.0
  %261 = vmatprep.subr.mxu0 0.0
  %262 = vmatpush1.msra.mxu0 0.0
  %263 = vmatprep.subr.mxu0 0.0
  %264 = vmatpush1.msra.mxu0 %v21
  %265 = vmatprep.subr.mxu0 0.0
  %266 = vmatpush1.msra.mxu0 %v20
  %267 = vmatprep.subr.mxu0 0.0
  %268 = vmatpush1.msra.mxu0 %v19
  %269 = vmatprep.subr.mxu0 0.0
  %270 = vmatpush1.msra.mxu0 %v18
  %271 = vmatprep.subr.mxu0 0.0
  %272 = vmatpush1.msra.mxu0 %v17
  %273 = vmatprep.subr.mxu0 0.0
  %274 = vmatpush1.msra.mxu0 %v16
  %275 = vmatprep.subr.mxu0 0.0
  %276 = vmatpush1.msra.mxu0 %v15
  %277 = vmatprep.subr.mxu0 0.0
  %278 = vmatpush1.msra.mxu0 %v14
  %279 = vmatprep.subr.mxu0 0.0
  %280 = vmatpush2.msra.mxu0 0.0
  %281 = vmatprep.subr.mxu0 0.0
  %282 = vmatpush2.msra.mxu0 0.0
  %283 = vmatprep.subr.mxu0 0.0
  %284 = vmatpush2.msra.mxu0 0.0
  %285 = vmatprep.subr.mxu0 0.0
  %286 = vmatpush2.msra.mxu0 0.0
  %287 = vmatprep.subr.mxu0 0.0
  %288 = vmatpush2.msra.mxu0 0.0
  %289 = vmatprep.subr.mxu0 0.0
  %290 = vmatpush2.msra.mxu0 0.0
  %291 = vmatprep.subr.mxu0 0.0
  %292 = vmatpush2.msra.mxu0 0.0
  %293 = vmatprep.subr.mxu0 0.0
  %294 = vmatpush2.msra.mxu0 0.0
  %295 = vmatprep.subr.mxu0 0.0
  %296 = vmatpush2.msra.mxu0 0.0
  %297 = vmatprep.subr.mxu0 0.0
  %298 = vmatpush2.msra.mxu0 0.0
  %299 = vmatprep.subr.mxu0 0.0
  %300 = vmatpush2.msra.mxu0 0.0
  %301 = vmatprep.subr.mxu0 0.0
  %302 = vmatpush2.msra.mxu0 0.0
  %303 = vmatprep.subr.mxu0 0.0
  %304 = vmatpush2.msra.mxu0 0.0
  %305 = vmatprep.subr.mxu0 0.0
  %306 = vmatpush2.msra.mxu0 0.0
  %307 = vmatprep.subr.mxu0 0.0
  %308 = vmatpush2.msra.mxu0 0.0
  %309 = vmatprep.subr.mxu0 0.0
  %310 = vmatpush2.msra.mxu0 0.0
  %311 = vmatprep.mubr.f32.mxu0 0.0
  %312 = vmatmul.mubr.f32.gmra.mxu0 %v242
  %v313 = vpop.f32.mrf.mxu0
  %v314 = vadd.f32 %v95, %v313
  %v315 = vpop.f32.mrf.mxu0
  %316 = vmatprep.mubr.f32.mxu0 0.0
  %317 = vmatmul.mubr.f32.gmra.mxu0 %v245
  %v318 = vpop.f32.mrf.mxu0
  %v319 = vadd.f32 %v95, %v318
  %v320 = vpop.f32.mrf.mxu0
  %321 = vdwg.mxu0
  %322 = vst.msk [vmem:[%s3 + $0x10] sm:$0xff] %vm178, %v314
  %323 = vst.msk [vmem:[%s3 + $0x18] sm:$0xff] %vm178, %v319
  // Predicated region
  $region14: #{_train_forward.21} parent=0 // pred_check
    _
  $region15: #{_train_forward.21} parent=0 // pred_check_branch
    %325 = sbr.rel (0) target = $region17
  $region16: #{_train_forward.21} parent=0 // pred_region
    _
  $region17: #{_train_forward.21} parent=0 // pred_fallthru
    _
  // Predicated region
  $region18: #{_train_forward.21} parent=0 // pred_check
    _
  $region19: #{_train_forward.21} parent=0 // pred_check_branch
    %327 = sbr.rel (0) target = $region21
  $region20: #{_train_forward.21} parent=0 // pred_region
    _
  $region21: #{_train_forward.21} parent=0 // pred_fallthru
    _

</llo_original>
